<compile_context>
chip_gen: v5e
topology: v5e:2x2
jax: 0.10.0
libtpu: 0.0.40
codegen_flags: <defaults>
</compile_context>

<pallas_src>
import jax
import jax.numpy as jnp
from jax.experimental import pallas as pl
from jax.experimental.pallas import tpu as pltpu


def it_vae_kernel(x_ref, eps_ref,
                  wback_ref, bback_ref,
                  w1_ref, b1_ref, wmv_ref, bmv_ref,
                  wd1_ref, bd1_ref, wd2_ref, bd2_ref,
                  wforth_ref, bforth_ref,
                  out_ref, kl_ref):
    """Single invocation: whole batch resident in VMEM, KL scalar to SMEM."""
    B = x_ref.shape[0]
    E = x_ref.shape[2]
    H = wback_ref.shape[0]

    wback = wback_ref[...]        # (H, S)
    bback = bback_ref[...]        # (H, 1)

    # back_outer_proj per batch element (B=2 statically unrolled), stacked into
    # a (B*H, E) activation matrix so the following E x E GEMMs have M = B*H.
    embeds = jnp.concatenate(
        [jnp.dot(wback, x_ref[b], preferred_element_type=jnp.float32) + bback
         for b in range(B)],
        axis=0)                                                     # (B*H, E)

    # VAE encoder: fc1 + fused (fc_mu | fc_var) projection.
    h1 = jnp.maximum(
        jnp.dot(embeds, w1_ref[...], preferred_element_type=jnp.float32)
        + b1_ref[...], 0.0)                                         # (B*H, E)
    muvar = (jnp.dot(h1, wmv_ref[...], preferred_element_type=jnp.float32)
             + bmv_ref[...])                                        # (B*H, 2E)
    mu = muvar[:, :E]                                               # (B*H, E)
    log_var = muvar[:, E:]                                          # (B*H, E)

    # reparameterize
    std = jnp.exp(0.5 * log_var)
    z = eps_ref[...] * std + mu                                     # (B*H, E)

    # VAE decoder
    d1 = jnp.maximum(
        jnp.dot(z, wd1_ref[...], preferred_element_type=jnp.float32)
        + bd1_ref[...], 0.0)                                        # (B*H, E)
    eh = (jnp.dot(d1, wd2_ref[...], preferred_element_type=jnp.float32)
          + bd2_ref[...])                                           # (B*H, E)

    # forth_outer_proj back to sequence length, per batch element.
    wforth = wforth_ref[...]      # (S, H)
    bforth = bforth_ref[...]      # (S, 1)
    for b in range(B):
        eh_b = eh[b * H:(b + 1) * H, :]                             # (H, E)
        out_b = (jnp.dot(wforth, eh_b, preferred_element_type=jnp.float32)
                 + bforth)                                          # (S, E)
        out_ref[b] = out_b.astype(out_ref.dtype)

    # KL divergence fully reduced in-kernel; exp(log_var) == std*std (reuse).
    kl_terms = 1.0 + log_var - mu * mu - std * std                  # (B*H, E)
    kl_ref[0, 0] = -0.5 * jnp.sum(kl_terms)


def it_vae_forward(x, eps, params):
    """x: [B,S,E] encoder hidden states, eps: [B,H,E] reparameterization noise."""
    B, S, E = x.shape
    H = eps.shape[1]
    p = params

    # Layout plumbing in the wrapper (free / tiny XLA ops):
    #  - eps folded to (B*H, E) rows ordered (b, h) to match kernel activations,
    #  - mu/var weights packed into one (E, 2E) matrix for a fused GEMM.
    eps_bh = eps.reshape(B * H, E)
    w_muvar = jnp.concatenate([p["enc_wmu"], p["enc_wvar"]], axis=1)   # (E, 2E)
    b_muvar = jnp.concatenate([p["enc_bmu"], p["enc_bvar"]], axis=1)   # (1, 2E)

    vmem = pl.BlockSpec(memory_space=pltpu.MemorySpace.VMEM)
    smem = pl.BlockSpec(memory_space=pltpu.MemorySpace.SMEM)

    out_hidden, kl_scalar = pl.pallas_call(
        it_vae_kernel,
        out_shape=(
            jax.ShapeDtypeStruct((B, S, E), jnp.float32),
            jax.ShapeDtypeStruct((1, 1), jnp.float32),
        ),
        in_specs=[vmem] * 14,
        out_specs=(vmem, smem),
        compiler_params=pltpu.CompilerParams(
            vmem_limit_bytes=32 * 1024 * 1024),
    )(x, eps_bh,
      p["w_back"], p["b_back"],
      p["enc_w1"], p["enc_b1"], w_muvar, b_muvar,
      p["dec_w1"], p["dec_b1"], p["dec_w2"], p["dec_b2"],
      p["w_forth"], p["b_forth"])

    return out_hidden, kl_scalar[0, 0]


def init_params(key, S, E, H):
    """Deterministic parameter init (PyTorch Linear layout, pre-transposed for kernel)."""
    ks = jax.random.split(key, 16)
    u = lambda k, shape, fan_in: jax.random.uniform(
        k, shape, jnp.float32, -1.0 / jnp.sqrt(fan_in), 1.0 / jnp.sqrt(fan_in))
    params = {
        # back_outer_proj: nn.Linear(S, H) -> weight [H, S], bias [H]
        "w_back": u(ks[0], (H, S), S),
        "b_back": u(ks[1], (H, 1), S),
        # VAEEncoder: fc1, fc_mu, fc_var : nn.Linear(E, E); pass W^T (in, out)
        "enc_w1":  u(ks[2], (E, E), E),
        "enc_b1":  u(ks[3], (1, E), E),
        "enc_wmu": u(ks[4], (E, E), E),
        "enc_bmu": u(ks[5], (1, E), E),
        "enc_wvar": u(ks[6], (E, E), E),
        "enc_bvar": u(ks[7], (1, E), E),
        # VAEDecoder: fc1, fc2 : nn.Linear(E, E); pass W^T
        "dec_w1": u(ks[8], (E, E), E),
        "dec_b1": u(ks[9], (1, E), E),
        "dec_w2": u(ks[10], (E, E), E),
        "dec_b2": u(ks[11], (1, E), E),
        # forth_outer_proj: nn.Linear(H, S) -> weight [S, H], bias [S]
        "w_forth": u(ks[12], (S, H), H),
        "b_forth": u(ks[13], (S, 1), H),
    }
    return params


def it_vae_reference(x, eps, p):
    """Pure-JAX reference of the same math for a sanity check."""
    embeds = jnp.einsum("bse,hs->bhe", x, p["w_back"]) + p["b_back"][None, :, 0][:, :, None]
    h1 = jnp.maximum(embeds @ p["enc_w1"] + p["enc_b1"], 0.0)
    mu = h1 @ p["enc_wmu"] + p["enc_bmu"]
    log_var = h1 @ p["enc_wvar"] + p["enc_bvar"]
    z = eps * jnp.exp(0.5 * log_var) + mu
    d1 = jnp.maximum(z @ p["dec_w1"] + p["dec_b1"], 0.0)
    embeds_hat = d1 @ p["dec_w2"] + p["dec_b2"]
    out = jnp.einsum("bhe,sh->bse", embeds_hat, p["w_forth"]) + p["b_forth"][None, :, 0][:, :, None]
    kl = -0.5 * jnp.sum(1.0 + log_var - mu * mu - jnp.exp(log_var))
    return out, kl


if __name__ == "__main__":
    # Small shapes consistent with the module: batch=2, max_sequence_len=16,
    # embed_dim=32, num_heads=4.
    B, S, E, H = 2, 16, 32, 4

    key = jax.random.PRNGKey(0)
    k_x, k_eps, k_p = jax.random.split(key, 3)

    x = jax.random.normal(k_x, (B, S, E), jnp.float32)      # encoder_hidden_states
    eps = jax.random.normal(k_eps, (B, H, E), jnp.float32)  # reparameterization noise
    params = init_params(k_p, S, E, H)

    out_hidden, kl = it_vae_forward(x, eps, params)
    out_hidden = jax.block_until_ready(out_hidden)
    kl = jax.block_until_ready(kl)

    ref_out, ref_kl = it_vae_reference(x, eps, params)
    assert jnp.allclose(out_hidden, ref_out, atol=1e-4, rtol=1e-4)
    assert jnp.allclose(kl, ref_kl, atol=1e-3, rtol=1e-3)

    print("KERNEL_OK")
</pallas_src>

<mosaic_0001>
module attributes {stable_mosaic.version = 11 : i64} {
  func.func @it_vae_kernel(%arg0: memref<2x16x32xf32, #tpu.memory_space<vmem>>, %arg1: memref<8x32xf32, #tpu.memory_space<vmem>>, %arg2: memref<4x16xf32, #tpu.memory_space<vmem>>, %arg3: memref<4x1xf32, #tpu.memory_space<vmem>>, %arg4: memref<32x32xf32, #tpu.memory_space<vmem>>, %arg5: memref<1x32xf32, #tpu.memory_space<vmem>>, %arg6: memref<32x64xf32, #tpu.memory_space<vmem>>, %arg7: memref<1x64xf32, #tpu.memory_space<vmem>>, %arg8: memref<32x32xf32, #tpu.memory_space<vmem>>, %arg9: memref<1x32xf32, #tpu.memory_space<vmem>>, %arg10: memref<32x32xf32, #tpu.memory_space<vmem>>, %arg11: memref<1x32xf32, #tpu.memory_space<vmem>>, %arg12: memref<16x4xf32, #tpu.memory_space<vmem>>, %arg13: memref<16x1xf32, #tpu.memory_space<vmem>>, %arg14: memref<2x16x32xf32, #tpu.memory_space<vmem>>, %arg15: memref<1x1xf32, #tpu.memory_space<smem>>) attributes {dimension_semantics = [], scalar_prefetch = 0 : i64, scratch_operands = 0 : i64, tpu.core_type = #tpu.core_type<tc>} {
    %c0 = arith.constant 0 : index
    %c0_0 = arith.constant 0 : index
    %0 = vector.load %arg2[%c0, %c0_0] : memref<4x16xf32, #tpu.memory_space<vmem>>, vector<4x16xf32>
    %c0_1 = arith.constant 0 : index
    %c0_2 = arith.constant 0 : index
    %1 = vector.load %arg3[%c0_1, %c0_2] : memref<4x1xf32, #tpu.memory_space<vmem>>, vector<4x1xf32>
    %c0_3 = arith.constant 0 : index
    %c0_4 = arith.constant 0 : index
    %c0_5 = arith.constant 0 : index
    %2 = vector.load %arg0[%c0_3, %c0_4, %c0_5] : memref<2x16x32xf32, #tpu.memory_space<vmem>>, vector<1x16x32xf32>
    %3 = vector.shape_cast %2 : vector<1x16x32xf32> to vector<16x32xf32>
    %cst = arith.constant dense<0.000000e+00> : vector<4x32xf32>
    %4 = tpu.matmul %0, %3, %cst {dimension_numbers = #tpu.dot_dimension_numbers<[1], [0], [0], [1], [0, 0, 1, 1], [], []>} : vector<4x16xf32>, vector<16x32xf32>, vector<4x32xf32> -> vector<4x32xf32>
    %5 = vector.broadcast %1 : vector<4x1xf32> to vector<4x32xf32>
    %6 = arith.addf %4, %5 : vector<4x32xf32>
    %c1 = arith.constant 1 : index
    %c0_6 = arith.constant 0 : index
    %c0_7 = arith.constant 0 : index
    %7 = vector.load %arg0[%c1, %c0_6, %c0_7] : memref<2x16x32xf32, #tpu.memory_space<vmem>>, vector<1x16x32xf32>
    %8 = vector.shape_cast %7 : vector<1x16x32xf32> to vector<16x32xf32>
    %cst_8 = arith.constant dense<0.000000e+00> : vector<4x32xf32>
    %9 = tpu.matmul %0, %8, %cst_8 {dimension_numbers = #tpu.dot_dimension_numbers<[1], [0], [0], [1], [0, 0, 1, 1], [], []>} : vector<4x16xf32>, vector<16x32xf32>, vector<4x32xf32> -> vector<4x32xf32>
    %10 = vector.broadcast %1 : vector<4x1xf32> to vector<4x32xf32>
    %11 = arith.addf %9, %10 : vector<4x32xf32>
    %12 = tpu.concatenate %6, %11 in 0 : vector<4x32xf32>, vector<4x32xf32> -> vector<8x32xf32>
    %c0_9 = arith.constant 0 : index
    %c0_10 = arith.constant 0 : index
    %13 = vector.load %arg4[%c0_9, %c0_10] : memref<32x32xf32, #tpu.memory_space<vmem>>, vector<32x32xf32>
    %cst_11 = arith.constant dense<0.000000e+00> : vector<8x32xf32>
    %14 = tpu.matmul %12, %13, %cst_11 {dimension_numbers = #tpu.dot_dimension_numbers<[1], [0], [0], [1], [0, 0, 1, 1], [], []>} : vector<8x32xf32>, vector<32x32xf32>, vector<8x32xf32> -> vector<8x32xf32>
    %c0_12 = arith.constant 0 : index
    %c0_13 = arith.constant 0 : index
    %15 = vector.load %arg5[%c0_12, %c0_13] : memref<1x32xf32, #tpu.memory_space<vmem>>, vector<1x32xf32>
    %16 = vector.broadcast %15 : vector<1x32xf32> to vector<8x32xf32>
    %17 = arith.addf %14, %16 : vector<8x32xf32>
    %cst_14 = arith.constant 0.000000e+00 : f32
    %18 = vector.broadcast %cst_14 : f32 to vector<8x32xf32>
    %19 = arith.maximumf %17, %18 : vector<8x32xf32>
    %c0_15 = arith.constant 0 : index
    %c0_16 = arith.constant 0 : index
    %20 = vector.load %arg6[%c0_15, %c0_16] : memref<32x64xf32, #tpu.memory_space<vmem>>, vector<32x64xf32>
    %cst_17 = arith.constant dense<0.000000e+00> : vector<8x64xf32>
    %21 = tpu.matmul %19, %20, %cst_17 {dimension_numbers = #tpu.dot_dimension_numbers<[1], [0], [0], [1], [0, 0, 1, 1], [], []>} : vector<8x32xf32>, vector<32x64xf32>, vector<8x64xf32> -> vector<8x64xf32>
    %c0_18 = arith.constant 0 : index
    %c0_19 = arith.constant 0 : index
    %22 = vector.load %arg7[%c0_18, %c0_19] : memref<1x64xf32, #tpu.memory_space<vmem>>, vector<1x64xf32>
    %23 = vector.broadcast %22 : vector<1x64xf32> to vector<8x64xf32>
    %24 = arith.addf %21, %23 : vector<8x64xf32>
    %25 = vector.extract_strided_slice %24 {offsets = [0, 0], sizes = [8, 32], strides = [1, 1]} : vector<8x64xf32> to vector<8x32xf32>
    %26 = vector.extract_strided_slice %24 {offsets = [0, 32], sizes = [8, 32], strides = [1, 1]} : vector<8x64xf32> to vector<8x32xf32>
    %cst_20 = arith.constant 5.000000e-01 : f32
    %27 = vector.broadcast %cst_20 : f32 to vector<8x32xf32>
    %28 = arith.mulf %27, %26 : vector<8x32xf32>
    %29 = math.exp %28 : vector<8x32xf32>
    %c0_21 = arith.constant 0 : index
    %c0_22 = arith.constant 0 : index
    %30 = vector.load %arg1[%c0_21, %c0_22] : memref<8x32xf32, #tpu.memory_space<vmem>>, vector<8x32xf32>
    %31 = arith.mulf %30, %29 : vector<8x32xf32>
    %32 = arith.addf %31, %25 : vector<8x32xf32>
    %c0_23 = arith.constant 0 : index
    %c0_24 = arith.constant 0 : index
    %33 = vector.load %arg8[%c0_23, %c0_24] : memref<32x32xf32, #tpu.memory_space<vmem>>, vector<32x32xf32>
    %cst_25 = arith.constant dense<0.000000e+00> : vector<8x32xf32>
    %34 = tpu.matmul %32, %33, %cst_25 {dimension_numbers = #tpu.dot_dimension_numbers<[1], [0], [0], [1], [0, 0, 1, 1], [], []>} : vector<8x32xf32>, vector<32x32xf32>, vector<8x32xf32> -> vector<8x32xf32>
    %c0_26 = arith.constant 0 : index
    %c0_27 = arith.constant 0 : index
    %35 = vector.load %arg9[%c0_26, %c0_27] : memref<1x32xf32, #tpu.memory_space<vmem>>, vector<1x32xf32>
    %36 = vector.broadcast %35 : vector<1x32xf32> to vector<8x32xf32>
    %37 = arith.addf %34, %36 : vector<8x32xf32>
    %cst_28 = arith.constant 0.000000e+00 : f32
    %38 = vector.broadcast %cst_28 : f32 to vector<8x32xf32>
    %39 = arith.maximumf %37, %38 : vector<8x32xf32>
    %c0_29 = arith.constant 0 : index
    %c0_30 = arith.constant 0 : index
    %40 = vector.load %arg10[%c0_29, %c0_30] : memref<32x32xf32, #tpu.memory_space<vmem>>, vector<32x32xf32>
    %cst_31 = arith.constant dense<0.000000e+00> : vector<8x32xf32>
    %41 = tpu.matmul %39, %40, %cst_31 {dimension_numbers = #tpu.dot_dimension_numbers<[1], [0], [0], [1], [0, 0, 1, 1], [], []>} : vector<8x32xf32>, vector<32x32xf32>, vector<8x32xf32> -> vector<8x32xf32>
    %c0_32 = arith.constant 0 : index
    %c0_33 = arith.constant 0 : index
    %42 = vector.load %arg11[%c0_32, %c0_33] : memref<1x32xf32, #tpu.memory_space<vmem>>, vector<1x32xf32>
    %43 = vector.broadcast %42 : vector<1x32xf32> to vector<8x32xf32>
    %44 = arith.addf %41, %43 : vector<8x32xf32>
    %c0_34 = arith.constant 0 : index
    %c0_35 = arith.constant 0 : index
    %45 = vector.load %arg12[%c0_34, %c0_35] : memref<16x4xf32, #tpu.memory_space<vmem>>, vector<16x4xf32>
    %c0_36 = arith.constant 0 : index
    %c0_37 = arith.constant 0 : index
    %46 = vector.load %arg13[%c0_36, %c0_37] : memref<16x1xf32, #tpu.memory_space<vmem>>, vector<16x1xf32>
    %47 = vector.extract_strided_slice %44 {offsets = [0, 0], sizes = [4, 32], strides = [1, 1]} : vector<8x32xf32> to vector<4x32xf32>
    %cst_38 = arith.constant dense<0.000000e+00> : vector<16x32xf32>
    %48 = tpu.matmul %45, %47, %cst_38 {dimension_numbers = #tpu.dot_dimension_numbers<[1], [0], [0], [1], [0, 0, 1, 1], [], []>} : vector<16x4xf32>, vector<4x32xf32>, vector<16x32xf32> -> vector<16x32xf32>
    %49 = vector.broadcast %46 : vector<16x1xf32> to vector<16x32xf32>
    %50 = arith.addf %48, %49 : vector<16x32xf32>
    %c0_39 = arith.constant 0 : index
    %c0_40 = arith.constant 0 : index
    %c0_41 = arith.constant 0 : index
    %51 = vector.load %arg14[%c0_39, %c0_40, %c0_41] : memref<2x16x32xf32, #tpu.memory_space<vmem>>, vector<1x16x32xf32>
    %52 = vector.shape_cast %51 : vector<1x16x32xf32> to vector<16x32xf32>
    %53 = vector.shape_cast %50 : vector<16x32xf32> to vector<1x16x32xf32>
    tpu.vector_store %arg14[%c0_39, %c0_40, %c0_41], %53 {strides = array<i32>} : memref<2x16x32xf32, #tpu.memory_space<vmem>>, vector<1x16x32xf32>,
    %54 = vector.extract_strided_slice %44 {offsets = [4, 0], sizes = [4, 32], strides = [1, 1]} : vector<8x32xf32> to vector<4x32xf32>
    %cst_42 = arith.constant dense<0.000000e+00> : vector<16x32xf32>
    %55 = tpu.matmul %45, %54, %cst_42 {dimension_numbers = #tpu.dot_dimension_numbers<[1], [0], [0], [1], [0, 0, 1, 1], [], []>} : vector<16x4xf32>, vector<4x32xf32>, vector<16x32xf32> -> vector<16x32xf32>
    %56 = vector.broadcast %46 : vector<16x1xf32> to vector<16x32xf32>
    %57 = arith.addf %55, %56 : vector<16x32xf32>
    %c1_43 = arith.constant 1 : index
    %c0_44 = arith.constant 0 : index
    %c0_45 = arith.constant 0 : index
    %58 = vector.load %arg14[%c1_43, %c0_44, %c0_45] : memref<2x16x32xf32, #tpu.memory_space<vmem>>, vector<1x16x32xf32>
    %59 = vector.shape_cast %58 : vector<1x16x32xf32> to vector<16x32xf32>
    %60 = vector.shape_cast %57 : vector<16x32xf32> to vector<1x16x32xf32>
    tpu.vector_store %arg14[%c1_43, %c0_44, %c0_45], %60 {strides = array<i32>} : memref<2x16x32xf32, #tpu.memory_space<vmem>>, vector<1x16x32xf32>,
    %cst_46 = arith.constant 1.000000e+00 : f32
    %61 = vector.broadcast %cst_46 : f32 to vector<8x32xf32>
    %62 = arith.addf %61, %26 : vector<8x32xf32>
    %63 = arith.mulf %25, %25 : vector<8x32xf32>
    %64 = arith.subf %62, %63 : vector<8x32xf32>
    %65 = arith.mulf %29, %29 : vector<8x32xf32>
    %66 = arith.subf %64, %65 : vector<8x32xf32>
    %67 = vector.shape_cast %66 : vector<8x32xf32> to vector<1x8x32xf32>
    %cst_47 = arith.constant dense<0.000000e+00> : vector<1xf32>
    %68 = vector.multi_reduction <add>, %67, %cst_47 [1, 2] : vector<1x8x32xf32> to vector<1xf32>
    %69 = vector.shape_cast %68 : vector<1xf32> to vector<1x1x1xf32>
    %70 = vector.extract %69[0, 0, 0] : f32 from vector<1x1x1xf32>
    %cst_48 = arith.constant -5.000000e-01 : f32
    %71 = arith.mulf %cst_48, %70 : f32
    %c0_49 = arith.constant 0 : index
    %c0_50 = arith.constant 0 : index
    %72 = memref.load %arg15[%c0_49, %c0_50] : memref<1x1xf32, #tpu.memory_space<smem>>
    memref.store %71, %arg15[%c0_49, %c0_50] : memref<1x1xf32, #tpu.memory_space<smem>>
    return
  }
}

</mosaic_0001>

<llo_original>
// kernel: tpu_custom_call.1
$region0: #{tpu_custom_call.1}
  #allocation0 [shape = 'u32[]', space=smem, size = 0x4, offset = 0x4, fixed_abs, tag = 'smem constant byte address 0x4 - core index']
  #allocation1 [shape = 'u32[72,128]{1,0:T(1,128)}', space=vmem, size = 0x9000, scoped, tag = 'internal scratch']
  %s0 = inlined_call_operand.vmem [shape: f32[2,16,32], index: 0, kind: input, shape index: {}]
  %s1 = inlined_call_operand.hbm [shape: f32[8,32], index: 1, kind: input, shape index: {}]
  %s2 = inlined_call_operand.vmem [shape: f32[4,16], index: 2, kind: input, shape index: {}]
  %s3 = inlined_call_operand.vmem [shape: f32[4,1], index: 3, kind: input, shape index: {}]
  %s4 = inlined_call_operand.hbm [shape: f32[32,32], index: 4, kind: input, shape index: {}]
  %s5 = inlined_call_operand.vmem [shape: f32[1,32], index: 5, kind: input, shape index: {}]
  %s6 = inlined_call_operand.hbm [shape: f32[32,64], index: 6, kind: input, shape index: {}]
  %s7 = inlined_call_operand.vmem [shape: f32[1,64], index: 7, kind: input, shape index: {}]
  %s8 = inlined_call_operand.hbm [shape: f32[32,32], index: 8, kind: input, shape index: {}]
  %s9 = inlined_call_operand.vmem [shape: f32[1,32], index: 9, kind: input, shape index: {}]
  %s10 = inlined_call_operand.hbm [shape: f32[32,32], index: 10, kind: input, shape index: {}]
  %s11 = inlined_call_operand.vmem [shape: f32[1,32], index: 11, kind: input, shape index: {}]
  %s12 = inlined_call_operand.vmem [shape: f32[16,4], index: 12, kind: input, shape index: {}]
  %s13 = inlined_call_operand.vmem [shape: f32[16,1], index: 13, kind: input, shape index: {}]
  %s14 = inlined_call_operand.hbm [shape: f32[2,16,32], index: 14, kind: output, shape index: {0}]
  %s15 = inlined_call_operand.hbm [shape: f32[1,1], index: 15, kind: output, shape index: {1}]
  %16 = xla_tuple %s14, %s15
  %s17 = sld [smem:[#allocation0]]
  $region94: #{tpu_custom_call.1} parent=0
    _
  %s19 = ssub.s32 1, %s17
  %s20 = scalar_select 0, %s19, %s17
  $region1: #{tpu_custom_call.1} parent=0
    #allocation2 [shape = 'u8[4096]{0}', space=vmem, size = 0x1000, scoped, tag = 'input window, operand 1, single buffered']
    #allocation3 [shape = 's32[1]{0}', space=sflag, size = 0x4, scoped, tag = 'scoped memory for tpu_custom_call.1']
    #allocation4 [shape = 's32[1]{0}', space=sflag, size = 0x4, scoped, tag = 'scoped memory for tpu_custom_call.1']
    #allocation5 [shape = 's32[1]{0}', space=sflag, size = 0x4, scoped, tag = 'scoped memory for tpu_custom_call.1']
    #allocation6 [shape = 'u8[16384]{0}', space=vmem, size = 0x4000, scoped, tag = 'input window, operand 4, single buffered']
    #allocation7 [shape = 's32[1]{0}', space=sflag, size = 0x4, scoped, tag = 'scoped memory for tpu_custom_call.1']
    #allocation8 [shape = 'u8[16384]{0}', space=vmem, size = 0x4000, scoped, tag = 'input window, operand 6, single buffered']
    #allocation9 [shape = 'u8[16384]{0}', space=vmem, size = 0x4000, scoped, tag = 'input window, operand 8, single buffered']
    #allocation10 [shape = 's32[1]{0}', space=sflag, size = 0x4, scoped, tag = 'scoped memory for tpu_custom_call.1']
    #allocation11 [shape = 'u8[16384]{0}', space=vmem, size = 0x4000, scoped, tag = 'input window, operand 10, single buffered']
    #allocation12 [shape = 'u8[16384]{0}', space=vmem, size = 0x4000, scoped, tag = 'output window, operand 0, single buffered']
    #allocation13 [shape = 'u8[512]{0}', space=smem, size = 0x200, scoped, tag = 'output window, operand 1, single buffered']
    %21 = vsyncpa [#allocation3], 0
    %22 = vsyncpa [#allocation7], 0
    %23 = vsyncpa [#allocation10], 0
    %24 = vsyncpa [#allocation4], 0
    %25 = vsyncpa [#allocation5], 0
    // Predicated region
    $region2: #{tpu_custom_call.1} parent=1 // pred_check
      _
    $region3: #{tpu_custom_call.1} parent=1 // pred_check_branch
      %27 = sbr.rel (0) target = $region5
    $region4: #{tpu_custom_call.1} parent=1 // pred_region
      _
    $region5: #{tpu_custom_call.1} parent=1 // pred_fallthru
      _
    // Predicated region
    $region6: #{tpu_custom_call.1} parent=1 // pred_check
      _
    $region7: #{tpu_custom_call.1} parent=1 // pred_check_branch
      %29 = sbr.rel (0) target = $region9
    $region8: #{tpu_custom_call.1} parent=1 // pred_region
      %31 = vsyncadd [#allocation3], 0
      %s33 = sshll.u32 %s1, 4
      %s34 = int_to_ptr.hbm [resolvable:$true] %s33
      %s35 = sshll.u32 [#allocation2], 4
      %s36 = int_to_ptr.vmem [resolvable:$true] %s35
      %38 = dma.hbm_to_vmem [thread:$0]  %s34, 128, %s36, [#allocation3]
    $region9: #{tpu_custom_call.1} parent=1 // pred_fallthru
      _
    // Predicated region
    $region10: #{tpu_custom_call.1} parent=1 // pred_check
      _
    $region11: #{tpu_custom_call.1} parent=1 // pred_check_branch
      %40 = sbr.rel (0) target = $region13
    $region12: #{tpu_custom_call.1} parent=1 // pred_region
      _
    $region13: #{tpu_custom_call.1} parent=1 // pred_fallthru
      _
    // Predicated region
    $region14: #{tpu_custom_call.1} parent=1 // pred_check
      _
    $region15: #{tpu_custom_call.1} parent=1 // pred_check_branch
      %42 = sbr.rel (0) target = $region17
    $region16: #{tpu_custom_call.1} parent=1 // pred_region
      _
    $region17: #{tpu_custom_call.1} parent=1 // pred_fallthru
      _
    // Predicated region
    $region18: #{tpu_custom_call.1} parent=1 // pred_check
      _
    $region19: #{tpu_custom_call.1} parent=1 // pred_check_branch
      %44 = sbr.rel (0) target = $region21
    $region20: #{tpu_custom_call.1} parent=1 // pred_region
      %46 = vsyncadd [#allocation7], 0
      %s47 = sshll.u32 %s4, 4
      %s48 = int_to_ptr.hbm [resolvable:$true] %s47
      %s49 = sshll.u32 [#allocation6], 4
      %s50 = int_to_ptr.vmem [resolvable:$true] %s49
      %55 = dma.hbm_to_vmem [thread:$0]  %s48, 512, %s50, [#allocation7], 128, 128, 8
    $region21: #{tpu_custom_call.1} parent=1 // pred_fallthru
      _
    // Predicated region
    $region22: #{tpu_custom_call.1} parent=1 // pred_check
      _
    $region23: #{tpu_custom_call.1} parent=1 // pred_check_branch
      %57 = sbr.rel (0) target = $region25
    $region24: #{tpu_custom_call.1} parent=1 // pred_region
      _
    $region25: #{tpu_custom_call.1} parent=1 // pred_fallthru
      _
    // Predicated region
    $region26: #{tpu_custom_call.1} parent=1 // pred_check
      _
    $region27: #{tpu_custom_call.1} parent=1 // pred_check_branch
      %59 = sbr.rel (0) target = $region29
    $region28: #{tpu_custom_call.1} parent=1 // pred_region
      %61 = vsyncadd [#allocation7], 0
      %s62 = sshll.u32 %s6, 4
      %s63 = int_to_ptr.hbm [resolvable:$true] %s62
      %s64 = sshll.u32 [#allocation8], 4
      %s65 = int_to_ptr.vmem [resolvable:$true] %s64
      %70 = dma.hbm_to_vmem [thread:$0]  %s63, 512, %s65, [#allocation7], 128, 128, 8
    $region29: #{tpu_custom_call.1} parent=1 // pred_fallthru
      _
    // Predicated region
    $region30: #{tpu_custom_call.1} parent=1 // pred_check
      _
    $region31: #{tpu_custom_call.1} parent=1 // pred_check_branch
      %72 = sbr.rel (0) target = $region33
    $region32: #{tpu_custom_call.1} parent=1 // pred_region
      _
    $region33: #{tpu_custom_call.1} parent=1 // pred_fallthru
      _
    // Predicated region
    $region34: #{tpu_custom_call.1} parent=1 // pred_check
      _
    $region35: #{tpu_custom_call.1} parent=1 // pred_check_branch
      %74 = sbr.rel (0) target = $region37
    $region36: #{tpu_custom_call.1} parent=1 // pred_region
      %76 = vsyncadd [#allocation10], 0
      %s77 = sshll.u32 %s8, 4
      %s78 = int_to_ptr.hbm [resolvable:$true] %s77
      %s79 = sshll.u32 [#allocation9], 4
      %s80 = int_to_ptr.vmem [resolvable:$true] %s79
      %85 = dma.hbm_to_vmem [thread:$0]  %s78, 512, %s80, [#allocation10], 128, 128, 8
    $region37: #{tpu_custom_call.1} parent=1 // pred_fallthru
      _
    // Predicated region
    $region38: #{tpu_custom_call.1} parent=1 // pred_check
      _
    $region39: #{tpu_custom_call.1} parent=1 // pred_check_branch
      %87 = sbr.rel (0) target = $region41
    $region40: #{tpu_custom_call.1} parent=1 // pred_region
      _
    $region41: #{tpu_custom_call.1} parent=1 // pred_fallthru
      _
    // Predicated region
    $region42: #{tpu_custom_call.1} parent=1 // pred_check
      _
    $region43: #{tpu_custom_call.1} parent=1 // pred_check_branch
      %89 = sbr.rel (0) target = $region45
    $region44: #{tpu_custom_call.1} parent=1 // pred_region
      %91 = vsyncadd [#allocation10], 0
      %s92 = sshll.u32 %s10, 4
      %s93 = int_to_ptr.hbm [resolvable:$true] %s92
      %s94 = sshll.u32 [#allocation11], 4
      %s95 = int_to_ptr.vmem [resolvable:$true] %s94
      %100 = dma.hbm_to_vmem [thread:$0]  %s93, 512, %s95, [#allocation10], 128, 128, 8
    $region45: #{tpu_custom_call.1} parent=1 // pred_fallthru
      _
    // Predicated region
    $region46: #{tpu_custom_call.1} parent=1 // pred_check
      _
    $region47: #{tpu_custom_call.1} parent=1 // pred_check_branch
      %102 = sbr.rel (0) target = $region49
    $region48: #{tpu_custom_call.1} parent=1 // pred_region
      _
    $region49: #{tpu_custom_call.1} parent=1 // pred_fallthru
      _
    // Predicated region
    $region50: #{tpu_custom_call.1} parent=1 // pred_check
      _
    $region51: #{tpu_custom_call.1} parent=1 // pred_check_branch
      %104 = sbr.rel (0) target = $region53
    $region52: #{tpu_custom_call.1} parent=1 // pred_region
      _
    $region53: #{tpu_custom_call.1} parent=1 // pred_fallthru
      _
    // Predicated region
    $region54: #{tpu_custom_call.1} parent=1 // pred_check
      _
    $region55: #{tpu_custom_call.1} parent=1 // pred_check_branch
      %106 = sbr.rel (0) target = $region57
    $region56: #{tpu_custom_call.1} parent=1 // pred_region
      _
    $region57: #{tpu_custom_call.1} parent=1 // pred_fallthru
      _
    // Predicated region
    $region58: #{tpu_custom_call.1} parent=1 // pred_check
      _
    $region59: #{tpu_custom_call.1} parent=1 // pred_check_branch
      %108 = sbr.rel (0) target = $region61
    $region60: #{tpu_custom_call.1} parent=1 // pred_region
      %110 = dma.done [#allocation3], 128
    $region61: #{tpu_custom_call.1} parent=1 // pred_fallthru
      _
    // Predicated region
    $region62: #{tpu_custom_call.1} parent=1 // pred_check
      _
    $region63: #{tpu_custom_call.1} parent=1 // pred_check_branch
      %112 = sbr.rel (0) target = $region65
    $region64: #{tpu_custom_call.1} parent=1 // pred_region
      %114 = dma.done [#allocation7], 512
    $region65: #{tpu_custom_call.1} parent=1 // pred_fallthru
      _
    // Predicated region
    $region66: #{tpu_custom_call.1} parent=1 // pred_check
      _
    $region67: #{tpu_custom_call.1} parent=1 // pred_check_branch
      %116 = sbr.rel (0) target = $region69
    $region68: #{tpu_custom_call.1} parent=1 // pred_region
      %118 = dma.done [#allocation7], 512
    $region69: #{tpu_custom_call.1} parent=1 // pred_fallthru
      _
    // Predicated region
    $region70: #{tpu_custom_call.1} parent=1 // pred_check
      _
    $region71: #{tpu_custom_call.1} parent=1 // pred_check_branch
      %120 = sbr.rel (0) target = $region73
    $region72: #{tpu_custom_call.1} parent=1 // pred_region
      %122 = dma.done [#allocation10], 512
    $region73: #{tpu_custom_call.1} parent=1 // pred_fallthru
      _
    // Predicated region
    $region74: #{tpu_custom_call.1} parent=1 // pred_check
      _
    $region75: #{tpu_custom_call.1} parent=1 // pred_check_branch
      %124 = sbr.rel (0) target = $region77
    $region76: #{tpu_custom_call.1} parent=1 // pred_region
      %126 = dma.done [#allocation10], 512
    $region77: #{tpu_custom_call.1} parent=1 // pred_fallthru
      _
    %v127 = vld [vmem:[%s2] sm:$0xf]
    %v128 = vld [vmem:[%s3] sm:$0xf]
    %v129 = vld [vmem:[%s0] sm:$0xff]
    %v130 = vld [vmem:[%s0 + $0x8] sm:$0xff]
    %132 = vset.pattern.permute.xlu0 0
    %133 = vperm.xlu0 %132, %v128
    %v134 = vpop.permute.xlu0 %133
    %vm136 = vcmask 130048
    %v138 = vsel %vm136, %v127, 0
    %140 = vmatpush.msra.mxu0 0.0
    %141 = vmatpush.msra.mxu0 0.0
    %142 = vmatpush.msra.mxu0 0.0
    %143 = vmatpush.msra.mxu0 0.0
    %144 = vmatpush.msra.mxu0 0.0
    %145 = vmatpush.msra.mxu0 0.0
    %146 = vmatpush.msra.mxu0 0.0
    %147 = vmatpush.msra.mxu0 0.0
    %148 = vmatpush.msra.mxu0 0.0
    %149 = vmatpush.msra.mxu0 0.0
    %150 = vmatpush.msra.mxu0 0.0
    %151 = vmatpush.msra.mxu0 0.0
    %152 = vmatpush.msra.mxu0 0.0
    %153 = vmatpush.msra.mxu0 0.0
    %154 = vmatpush.msra.mxu0 %v130
    %155 = vmatpush.msra.mxu0 %v129
    %156 = vmatmul.f32.gmra.mxu0 %v138
    %v157 = vpop.f32.mrf.mxu0
    %v158 = vadd.f32 %v134, %v157
    %159 = vdwg.mxu0
    %s160 = scalar_lea.vmem %s0, 16
    %v161 = vld [vmem:[%s160] sm:$0xff]
    %v162 = vld [vmem:[%s160 + $0x8] sm:$0xff]
    %163 = vmatpush.msra.mxu0 0.0
    %164 = vmatpush.msra.mxu0 0.0
    %165 = vmatpush.msra.mxu0 0.0
    %166 = vmatpush.msra.mxu0 0.0
    %167 = vmatpush.msra.mxu0 0.0
    %168 = vmatpush.msra.mxu0 0.0
    %169 = vmatpush.msra.mxu0 0.0
    %170 = vmatpush.msra.mxu0 0.0
    %171 = vmatpush.msra.mxu0 0.0
    %172 = vmatpush.msra.mxu0 0.0
    %173 = vmatpush.msra.mxu0 0.0
    %174 = vmatpush.msra.mxu0 0.0
    %175 = vmatpush.msra.mxu0 0.0
    %176 = vmatpush.msra.mxu0 0.0
    %177 = vmatpush.msra.mxu0 %v162
    %178 = vmatpush.msra.mxu0 %v161
    %179 = vmatmul.f32.gmra.mxu0 %v138
    %v180 = vpop.f32.mrf.mxu0
    %v181 = vadd.f32 %v134, %v180
    %182 = vdwg.mxu0
    %v184 = vrot.slane %v181, 4
    %vm186 = vcmask 1043456
    %v187 = vsel %vm186, %v158, %v184
    %v188 = vld [vmem:[#allocation6] sm:$0xff]
    %v189 = vld [vmem:[#allocation6 + $0x8] sm:$0xff]
    %v190 = vld [vmem:[#allocation6 + $0x10] sm:$0xff]
    %v191 = vld [vmem:[#allocation6 + $0x18] sm:$0xff]
    %v192 = vld [vmem:[%s5] sm:$0x1]
    %v194 = vperm.slane %v192, 0
    %vm196 = vcmask 261120
    %v198 = vsel %vm196, %v187, 0
    %200 = vmatpush.msra.mxu0 0.0
    %201 = vmatpush.msra.mxu0 0.0
    %202 = vmatpush.msra.mxu0 0.0
    %203 = vmatpush.msra.mxu0 0.0
    %204 = vmatpush.msra.mxu0 0.0
    %205 = vmatpush.msra.mxu0 0.0
    %206 = vmatpush.msra.mxu0 0.0
    %207 = vmatpush.msra.mxu0 0.0
    %208 = vmatpush.msra.mxu0 0.0
    %209 = vmatpush.msra.mxu0 0.0
    %210 = vmatpush.msra.mxu0 0.0
    %211 = vmatpush.msra.mxu0 0.0
    %212 = vmatpush.msra.mxu0 %v191
    %213 = vmatpush.msra.mxu0 %v190
    %214 = vmatpush.msra.mxu0 %v189
    %215 = vmatpush.msra.mxu0 %v188
    %216 = vmatmul.f32.gmra.mxu0 %v198
    %v217 = vpop.f32.mrf.mxu0
    %v218 = vadd.f32 %v194, %v217
    %219 = vdwg.mxu0
    %v220 = vmax.f32 %v218, 0.0
    %v221 = vld [vmem:[#allocation8] sm:$0xff]
    %v222 = vld [vmem:[#allocation8 + $0x8] sm:$0xff]
    %v223 = vld [vmem:[#allocation8 + $0x10] sm:$0xff]
    %v224 = vld [vmem:[#allocation8 + $0x18] sm:$0xff]
    %v225 = vld [vmem:[%s7] sm:$0x1]
    %v227 = vperm.slane %v225, 0
    %v230 = vsel %vm196, %v220, 0
    %232 = vmatpush.msra.mxu0 0.0
    %233 = vmatpush.msra.mxu0 0.0
    %234 = vmatpush.msra.mxu0 0.0
    %235 = vmatpush.msra.mxu0 0.0
    %236 = vmatpush.msra.mxu0 0.0
    %237 = vmatpush.msra.mxu0 0.0
    %238 = vmatpush.msra.mxu0 0.0
    %239 = vmatpush.msra.mxu0 0.0
    %240 = vmatpush.msra.mxu0 0.0
    %241 = vmatpush.msra.mxu0 0.0
    %242 = vmatpush.msra.mxu0 0.0
    %243 = vmatpush.msra.mxu0 0.0
    %244 = vmatpush.msra.mxu0 %v224
    %245 = vmatpush.msra.mxu0 %v223
    %246 = vmatpush.msra.mxu0 %v222
    %247 = vmatpush.msra.mxu0 %v221
    %248 = vmatmul.f32.gmra.mxu0 %v230
    %v249 = vpop.f32.mrf.mxu0
    %v250 = vadd.f32 %v227, %v249
    %251 = vdwg.mxu0
    %v252 = vmul.f32 %v250, 0.5
    %v253 = vmul.f32 %v252, 1.442695
    %v254 = vpow.pop %v253
    %v255 = vld [vmem:[#allocation2] sm:$0xff]
    %257 = vrot.lane.b32.xlu0 %v254, 96
    %v258 = vpop.permute.xlu0 %257
    %v260 = vmul.f32 %v255, %v258
    %v261 = vadd.f32 %v260, %v250
    %v262 = vld [vmem:[#allocation9] sm:$0xff]
    %v263 = vld [vmem:[#allocation9 + $0x8] sm:$0xff]
    %v264 = vld [vmem:[#allocation9 + $0x10] sm:$0xff]
    %v265 = vld [vmem:[#allocation9 + $0x18] sm:$0xff]
    %v266 = vld [vmem:[%s9] sm:$0x1]
    %v268 = vperm.slane %v266, 0
    %v271 = vsel %vm196, %v261, 0
    %273 = vmatpush.msra.mxu0 0.0
    %274 = vmatpush.msra.mxu0 0.0
    %275 = vmatpush.msra.mxu0 0.0
    %276 = vmatpush.msra.mxu0 0.0
    %277 = vmatpush.msra.mxu0 0.0
    %278 = vmatpush.msra.mxu0 0.0
    %279 = vmatpush.msra.mxu0 0.0
    %280 = vmatpush.msra.mxu0 0.0
    %281 = vmatpush.msra.mxu0 0.0
    %282 = vmatpush.msra.mxu0 0.0
    %283 = vmatpush.msra.mxu0 0.0
    %284 = vmatpush.msra.mxu0 0.0
    %285 = vmatpush.msra.mxu0 %v265
    %286 = vmatpush.msra.mxu0 %v264
    %287 = vmatpush.msra.mxu0 %v263
    %288 = vmatpush.msra.mxu0 %v262
    %289 = vmatmul.f32.gmra.mxu0 %v271
    %v290 = vpop.f32.mrf.mxu0
    %v291 = vadd.f32 %v268, %v290
    %292 = vdwg.mxu0
    %v293 = vmax.f32 %v291, 0.0
    %v294 = vld [vmem:[#allocation11] sm:$0xff]
    %v295 = vld [vmem:[#allocation11 + $0x8] sm:$0xff]
    %v296 = vld [vmem:[#allocation11 + $0x10] sm:$0xff]
    %v297 = vld [vmem:[#allocation11 + $0x18] sm:$0xff]
    %v298 = vld [vmem:[%s11] sm:$0x1]
    %v300 = vperm.slane %v298, 0
    %v303 = vsel %vm196, %v293, 0
    %305 = vmatpush.msra.mxu0 0.0
    %306 = vmatpush.msra.mxu0 0.0
    %307 = vmatpush.msra.mxu0 0.0
    %308 = vmatpush.msra.mxu0 0.0
    %309 = vmatpush.msra.mxu0 0.0
    %310 = vmatpush.msra.mxu0 0.0
    %311 = vmatpush.msra.mxu0 0.0
    %312 = vmatpush.msra.mxu0 0.0
    %313 = vmatpush.msra.mxu0 0.0
    %314 = vmatpush.msra.mxu0 0.0
    %315 = vmatpush.msra.mxu0 0.0
    %316 = vmatpush.msra.mxu0 0.0
    %317 = vmatpush.msra.mxu0 %v297
    %318 = vmatpush.msra.mxu0 %v296
    %319 = vmatpush.msra.mxu0 %v295
    %320 = vmatpush.msra.mxu0 %v294
    %321 = vmatmul.f32.gmra.mxu0 %v303
    %v322 = vpop.f32.mrf.mxu0
    %v323 = vadd.f32 %v300, %v322
    %324 = vdwg.mxu0
    %v325 = vld [vmem:[%s12] sm:$0xff]
    %v326 = vld [vmem:[%s12 + $0x8] sm:$0xff]
    %v327 = vld [vmem:[%s13] sm:$0xff]
    %v328 = vld [vmem:[%s13 + $0x8] sm:$0xff]
    %330 = vset.pattern.permute.xlu0 0
    %331 = vperm.xlu0 %330, %v327
    %v332 = vpop.permute.xlu0 %331
    %335 = vset.pattern.permute.xlu0 0
    %336 = vperm.xlu0 %335, %v328
    %v337 = vpop.permute.xlu0 %336
    %vm339 = vcmask 31744
    %v341 = vsel %vm339, %v325, 0
    %v344 = vsel %vm339, %v326, 0
    %v347 = vsel %vm186, %v323, 0
    %349 = vmatpush.msra.mxu0 0.0
    %350 = vmatpush.msra.mxu0 0.0
    %351 = vmatpush.msra.mxu0 0.0
    %352 = vmatpush.msra.mxu0 0.0
    %353 = vmatpush.msra.mxu0 0.0
    %354 = vmatpush.msra.mxu0 0.0
    %355 = vmatpush.msra.mxu0 0.0
    %356 = vmatpush.msra.mxu0 0.0
    %357 = vmatpush.msra.mxu0 0.0
    %358 = vmatpush.msra.mxu0 0.0
    %359 = vmatpush.msra.mxu0 0.0
    %360 = vmatpush.msra.mxu0 0.0
    %361 = vmatpush.msra.mxu0 0.0
    %362 = vmatpush.msra.mxu0 0.0
    %363 = vmatpush.msra.mxu0 0.0
    %364 = vmatpush.msra.mxu0 %v347
    %365 = vmatmul.f32.gmra.mxu0 %v341
    %v366 = vpop.f32.mrf.mxu0
    %v367 = vadd.f32 %v332, %v366
    %368 = vmatmul.f32.gmra.mxu0 %v344
    %v369 = vpop.f32.mrf.mxu0
    %v370 = vadd.f32 %v337, %v369
    %371 = vdwg.mxu0
    %372 = vst.msk [vmem:[#allocation12] sm:$0xff] %vm196, %v367
    %373 = vst.msk [vmem:[#allocation12 + $0x8] sm:$0xff] %vm196, %v370
    %v374 = vrot.slane %v323, 4
    %v375 = vsel %vm186, %v374, 0
    %377 = vmatpush.msra.mxu0 0.0
    %378 = vmatpush.msra.mxu0 0.0
    %379 = vmatpush.msra.mxu0 0.0
    %380 = vmatpush.msra.mxu0 0.0
    %381 = vmatpush.msra.mxu0 0.0
    %382 = vmatpush.msra.mxu0 0.0
    %383 = vmatpush.msra.mxu0 0.0
    %384 = vmatpush.msra.mxu0 0.0
    %385 = vmatpush.msra.mxu0 0.0
    %386 = vmatpush.msra.mxu0 0.0
    %387 = vmatpush.msra.mxu0 0.0
    %388 = vmatpush.msra.mxu0 0.0
    %389 = vmatpush.msra.mxu0 0.0
    %390 = vmatpush.msra.mxu0 0.0
    %391 = vmatpush.msra.mxu0 0.0
    %392 = vmatpush.msra.mxu0 %v375
    %393 = vmatmul.f32.gmra.mxu0 %v341
    %v394 = vpop.f32.mrf.mxu0
    %v395 = vadd.f32 %v332, %v394
    %396 = vmatmul.f32.gmra.mxu0 %v344
    %v397 = vpop.f32.mrf.mxu0
    %v398 = vadd.f32 %v337, %v397
    %399 = vdwg.mxu0
    %s400 = scalar_lea.vmem [#allocation12], 16
    %401 = vst.msk [vmem:[%s400] sm:$0xff] %vm196, %v395
    %402 = vst.msk [vmem:[%s400 + $0x8] sm:$0xff] %vm196, %v398
    %v403 = vadd.f32 %v250, 1.0
    %v404 = vmul.f32 %v250, %v250
    %406 = vrot.lane.b32.xlu0 %v404, 32
    %v407 = vpop.permute.xlu0 %406
    %v409 = vsub.f32 %v403, %v407
    %v410 = vmul.f32 %v254, %v254
    %v411 = vsub.f32 %v409, %v410
    %413 = vrot.lane.b32.xlu0 %v411, 96
    %v414 = vpop.permute.xlu0 %413
    %v416 = vsel %vm196, %v414, 0.0
    %417 = vadd.xlane.f32.xlu0 %v416
    %v418 = vpop.xlane.xlu0 %417
    %v419 = vrot.slane %v418, 4
    %v420 = vadd.f32 %v418, %v419
    %v421 = vrot.slane %v420, 2
    %v422 = vadd.f32 %v420, %v421
    %v423 = vrot.slane %v422, 1
    %v424 = vadd.f32 %v422, %v423
    %s425 = vtos %v424
    %s426 = smul.f32 %s425, -0.5
    %s427 = scalar_lea.smem [#allocation13], 0
    %428 = sst [smem:[%s427]] %s426
    // Predicated region
    $region78: #{tpu_custom_call.1} parent=1 // pred_check
      _
    $region79: #{tpu_custom_call.1} parent=1 // pred_check_branch
      %430 = sbr.rel (0) target = $region81
    $region80: #{tpu_custom_call.1} parent=1 // pred_region
      %432 = vsyncadd [#allocation4], 0
      %s433 = sshll.u32 [#allocation12], 4
      %s434 = int_to_ptr.vmem [resolvable:$true] %s433
      %s435 = sshll.u32 %s14, 4
      %s436 = int_to_ptr.hbm [resolvable:$true] %s435
      %441 = dma.vmem_to_hbm [thread:$0]  %s434, 512, %s436, [#allocation4], 128, 128, 8
    $region81: #{tpu_custom_call.1} parent=1 // pred_fallthru
      _
    // Predicated region
    $region82: #{tpu_custom_call.1} parent=1 // pred_check
      _
    $region83: #{tpu_custom_call.1} parent=1 // pred_check_branch
      %443 = sbr.rel (0) target = $region85
    $region84: #{tpu_custom_call.1} parent=1 // pred_region
      %445 = vsyncadd [#allocation5], 0
      %s447 = sshll.u32 %s15, 4
      %s448 = int_to_ptr.hbm [resolvable:$true] %s447
      %450 = dma.smem_to_hbm [#allocation13], 16, %s448, [#allocation5]
    $region85: #{tpu_custom_call.1} parent=1 // pred_fallthru
      _
    // Predicated region
    $region86: #{tpu_custom_call.1} parent=1 // pred_check
      _
    $region87: #{tpu_custom_call.1} parent=1 // pred_check_branch
      %452 = sbr.rel (0) target = $region89
    $region88: #{tpu_custom_call.1} parent=1 // pred_region
      %454 = dma.done [#allocation4], 512
    $region89: #{tpu_custom_call.1} parent=1 // pred_fallthru
      _
    // Predicated region
    $region90: #{tpu_custom_call.1} parent=1 // pred_check
      _
    $region91: #{tpu_custom_call.1} parent=1 // pred_check_branch
      %456 = sbr.rel (0) target = $region93
    $region92: #{tpu_custom_call.1} parent=1 // pred_region
      %458 = dma.done [#allocation5], 16
    $region93: #{tpu_custom_call.1} parent=1 // pred_fallthru
      _
    %459 = sfence
    %460 = vsyncpa [#allocation3], 1
    %461 = vsyncpa [#allocation7], 1
    %462 = vsyncpa [#allocation10], 1
    %463 = vsyncpa [#allocation4], 1
    %464 = vsyncpa [#allocation5], 1

</llo_original>
